<compile_context>
chip_gen: v5e
topology: v5e:2x2
jax: 0.10.0
libtpu: 0.0.40
codegen_flags: <defaults>
</compile_context>

<pallas_src>
import functools

import jax
import jax.numpy as jnp
from jax import lax
from jax.experimental import pallas as pl
from jax.experimental.pallas import tpu as pltpu


_SQRT_HALF = 0.7071067811865476


def _round_up(x, m):
    return (x + m - 1) // m * m


def _choose_tb(b):
    # Batch tile: sublane-aligned, capped so double-buffered tiles stay tiny
    # even on v7x's 64 MiB VMEM.
    if b >= 256:
        return 256
    return _round_up(max(b, 8), 8)


# ---------------------------------------------------------------------------
# Elementwise helpers (VPU/EUP).
# ---------------------------------------------------------------------------
def _gelu_exact(x):
    # torch.nn.GELU() default: 0.5 * x * (1 + erf(x / sqrt(2))).
    return 0.5 * x * (1.0 + lax.erf(x * _SQRT_HALF))


def _softplus(x):
    # Numerically stable log(1 + exp(x)), matches torch.nn.Softplus in f32.
    return jnp.maximum(x, 0.0) + jnp.log(1.0 + jnp.exp(-jnp.abs(x)))


def _sigmoid_exact(x):
    return 1.0 / (1.0 + jnp.exp(-x))


# ---------------------------------------------------------------------------
# Pallas kernel: the entire MSTODE forward for one batch tile.
# ---------------------------------------------------------------------------
def mstode_kernel(h_ref, in_proj_ref, b_in_ref, out_proj_ref, b_space_ref,
                  b_time_ref, gate_w_ref, gate_b_ref, out_ref, *, sp):
    """sp = padded space-hidden width (128-aligned split point)."""
    mm_dtype = in_proj_ref.dtype

    h = h_ref[...]                                       # [TB, HP] f32 (zero-padded)

    # Fused input projections: one bf16 MXU matmul -> both branch pre-activations.
    #   columns [0, sp)        -> space_net hidden (GELU)
    #   columns [sp, sp + tp)  -> time_net hidden  (Softplus)
    hid = (jnp.dot(h.astype(mm_dtype), in_proj_ref[...],
                   preferred_element_type=jnp.float32)
           + b_in_ref[...])                              # [TB, sp + tp] f32
    s_hid = _gelu_exact(hid[:, :sp])                     # 128-aligned static slice
    t_hid = _softplus(hid[:, sp:])

    # Output projections (kept separate: gating needs both derivatives).
    out_proj = out_proj_ref[...]                         # [sp + tp, HP] bf16
    space_deriv = (jnp.dot(s_hid.astype(mm_dtype), out_proj[:sp, :],
                           preferred_element_type=jnp.float32)
                   + b_space_ref[...])                   # [TB, HP] f32
    time_deriv = (jnp.dot(t_hid.astype(mm_dtype), out_proj[sp:, :],
                          preferred_element_type=jnp.float32)
                  + b_time_ref[...])                     # [TB, HP] f32

    # fusion_gate: sigmoid(Linear(cat([space, time]), 2)) as two fused VPU
    # multiply + cross-lane (XLU) reductions -> [TB, 1] gates, broadcast back.
    gw = gate_w_ref[...]                                 # [4, HP] f32
    gl0 = (jnp.sum(space_deriv * gw[0:1, :] + time_deriv * gw[1:2, :],
                   axis=-1, keepdims=True) + gate_b_ref[0])
    gl1 = (jnp.sum(space_deriv * gw[2:3, :] + time_deriv * gw[3:4, :],
                   axis=-1, keepdims=True) + gate_b_ref[1])
    g0 = pl.reciprocal(1.0 + jnp.exp(-gl0), approx=True)  # sigmoid; divide -> EUP
    g1 = pl.reciprocal(1.0 + jnp.exp(-gl1), approx=True)

    out_ref[...] = g0 * space_deriv + g1 * time_deriv    # lane-dense [TB, HP] store


# ---------------------------------------------------------------------------
# Wrapper
# ---------------------------------------------------------------------------
@jax.jit
def mstode_forward(t, h, packed_params):
    # `t` is part of the ODE-function signature but unused by the module.
    del t
    in_proj, b_in, out_proj, b_space, b_time, gate_w, gate_b = packed_params

    B, H = h.shape
    HP = _round_up(H, 128)
    SP = _round_up(2 * H, 128)
    TP = _round_up(H // 2, 128)
    TB = _choose_tb(B)
    B_pad = _round_up(B, TB)

    # Lane/sublane-dense padded input (zero rows/cols contribute nothing).
    h_p = jnp.zeros((B_pad, HP), jnp.float32).at[:B, :H].set(h.astype(jnp.float32))

    const2d = lambda shape: pl.BlockSpec(shape, lambda i: (0, 0))  # weights resident
    kernel = functools.partial(mstode_kernel, sp=SP)

    out_p = pl.pallas_call(
        kernel,
        out_shape=jax.ShapeDtypeStruct((B_pad, HP), jnp.float32),
        grid=(B_pad // TB,),
        in_specs=[
            pl.BlockSpec((TB, HP), lambda i: (i, 0)),        # h tile (pipelined)
            const2d((HP, SP + TP)),                          # fused input proj (bf16)
            const2d((1, SP + TP)),                           # fused input bias
            const2d((SP + TP, HP)),                          # stacked output projs (bf16)
            const2d((1, HP)),                                # space bias
            const2d((1, HP)),                                # time bias
            const2d((4, HP)),                                # gate weight rows
            pl.BlockSpec(memory_space=pltpu.MemorySpace.SMEM),  # gate bias scalars
        ],
        out_specs=pl.BlockSpec((TB, HP), lambda i: (i, 0)),
        compiler_params=pltpu.CompilerParams(
            dimension_semantics=("parallel",)),              # v7x: shard batch on 2 TCs
    )(h_p, in_proj, b_in, out_proj, b_space, b_time, gate_w, gate_b)

    return out_p[:B, :H]


# ---------------------------------------------------------------------------
# Parameters (torch layout) + packing into padded, lane-dense kernel operands.
# ---------------------------------------------------------------------------
def init_torch_params(key, hidden_dim):
    """Synthetic parameters in torch nn.Linear layout (weight=[out,in], bias=[out])."""
    H = hidden_dim
    ks = jax.random.split(key, 10)
    s = 0.1
    sw1 = s * jax.random.normal(ks[0], (2 * H, H), jnp.float32)
    sb1 = s * jax.random.normal(ks[1], (2 * H,), jnp.float32)
    sw2 = s * jax.random.normal(ks[2], (H, 2 * H), jnp.float32)
    sb2 = s * jax.random.normal(ks[3], (H,), jnp.float32)
    tw1 = s * jax.random.normal(ks[4], (H // 2, H), jnp.float32)
    tb1 = s * jax.random.normal(ks[5], (H // 2,), jnp.float32)
    tw2 = s * jax.random.normal(ks[6], (H, H // 2), jnp.float32)
    tb2 = s * jax.random.normal(ks[7], (H,), jnp.float32)
    gw = s * jax.random.normal(ks[8], (2, 2 * H), jnp.float32)
    gb = s * jax.random.normal(ks[9], (2,), jnp.float32)
    return (sw1, sb1, sw2, sb2, tw1, tb1, tw2, tb2, gw, gb)


def pack_params(torch_params, hidden_dim, matmul_dtype=jnp.bfloat16):
    """Pack the 11 torch tensors into 7 padded, lane-dense kernel operands."""
    H = hidden_dim
    S, T = 2 * H, H // 2
    HP = _round_up(H, 128)
    SP = _round_up(S, 128)
    TP = _round_up(T, 128)
    sw1, sb1, sw2, sb2, tw1, tb1, tw2, tb2, gw, gb = torch_params

    # Fused input projection [HP, SP + TP]; zero padding keeps padded lanes exact 0.
    in_proj = jnp.zeros((HP, SP + TP), jnp.float32)
    in_proj = in_proj.at[:H, :S].set(sw1.T)
    in_proj = in_proj.at[:H, SP:SP + T].set(tw1.T)
    b_in = jnp.zeros((1, SP + TP), jnp.float32)
    b_in = b_in.at[0, :S].set(sb1).at[0, SP:SP + T].set(tb1)

    # Stacked output projections [SP + TP, HP]; rows [0,SP) space, [SP,SP+TP) time.
    out_proj = jnp.zeros((SP + TP, HP), jnp.float32)
    out_proj = out_proj.at[:S, :H].set(sw2.T)
    out_proj = out_proj.at[SP:SP + T, :H].set(tw2.T)
    b_space = jnp.zeros((1, HP), jnp.float32).at[0, :H].set(sb2)
    b_time = jnp.zeros((1, HP), jnp.float32).at[0, :H].set(tb2)

    # Gate rows: (gate0*space, gate0*time, gate1*space, gate1*time).
    gate_w = jnp.zeros((4, HP), jnp.float32)
    gate_w = gate_w.at[0, :H].set(gw[0, :H]).at[1, :H].set(gw[0, H:])
    gate_w = gate_w.at[2, :H].set(gw[1, :H]).at[3, :H].set(gw[1, H:])
    gate_b = gb.astype(jnp.float32)                      # (2,) -> SMEM scalars

    return (in_proj.astype(matmul_dtype), b_in, out_proj.astype(matmul_dtype),
            b_space, b_time, gate_w, gate_b)


def mstode_reference(t, h, torch_params):
    """Pure-JAX f32 reference mirroring the PyTorch forward (torch-layout params)."""
    del t
    sw1, sb1, sw2, sb2, tw1, tb1, tw2, tb2, gw, gb = torch_params
    space = _gelu_exact(h @ sw1.T + sb1) @ sw2.T + sb2
    time = _softplus(h @ tw1.T + tb1) @ tw2.T + tb2
    gates = _sigmoid_exact(jnp.concatenate([space, time], axis=-1) @ gw.T + gb)
    return gates[:, 0:1] * space + gates[:, 1:2] * time


if __name__ == "__main__":
    B, H = 8, 32
    key = jax.random.PRNGKey(0)
    k_h, k_p = jax.random.split(key)

    h = jax.random.normal(k_h, (B, H), jnp.float32)
    t = jnp.float32(0.0)  # unused by the module's forward
    torch_params = init_torch_params(k_p, H)
    packed = pack_params(torch_params, H)  # bf16 matmul weights

    out = mstode_forward(t, h, packed)
    out = jax.block_until_ready(out)

    ref = mstode_reference(t, h, torch_params)
    assert out.shape == (B, H) and out.dtype == jnp.float32
    max_err = float(jnp.max(jnp.abs(out - ref)))
    # bf16 MXU path + approx reciprocal gate sigmoid: validate at bf16 tolerance.
    assert max_err < 2e-2, f"kernel/reference mismatch: max abs err = {max_err}"

    print("KERNEL_OK")
</pallas_src>

<mosaic_0001>
module attributes {stable_mosaic.version = 11 : i64} {
  func.func @mstode_kernel(%arg0: i32, %arg1: memref<8x128xf32, #tpu.memory_space<vmem>>, %arg2: memref<128x256xbf16, #tpu.memory_space<vmem>>, %arg3: memref<1x256xf32, #tpu.memory_space<vmem>>, %arg4: memref<256x128xbf16, #tpu.memory_space<vmem>>, %arg5: memref<1x128xf32, #tpu.memory_space<vmem>>, %arg6: memref<1x128xf32, #tpu.memory_space<vmem>>, %arg7: memref<4x128xf32, #tpu.memory_space<vmem>>, %arg8: memref<2xf32, #tpu.memory_space<smem>>, %arg9: memref<8x128xf32, #tpu.memory_space<vmem>>) attributes {dimension_semantics = [#tpu.dimension_semantics<parallel>], iteration_bounds = array<i64: 1>, scalar_prefetch = 0 : i64, scratch_operands = 0 : i64, tpu.core_type = #tpu.core_type<tc>, window_params = [{transform_indices = @transform_0, window_bounds = array<i64: 8, 128>}, {pipeline_mode = #tpu.pipeline_mode<synchronous>, transform_indices = @transform_1, window_bounds = array<i64: 128, 256>}, {pipeline_mode = #tpu.pipeline_mode<synchronous>, transform_indices = @transform_2, window_bounds = array<i64: 1, 256>}, {pipeline_mode = #tpu.pipeline_mode<synchronous>, transform_indices = @transform_3, window_bounds = array<i64: 256, 128>}, {pipeline_mode = #tpu.pipeline_mode<synchronous>, transform_indices = @transform_4, window_bounds = array<i64: 1, 128>}, {pipeline_mode = #tpu.pipeline_mode<synchronous>, transform_indices = @transform_5, window_bounds = array<i64: 1, 128>}, {pipeline_mode = #tpu.pipeline_mode<synchronous>, transform_indices = @transform_6, window_bounds = array<i64: 4, 128>}, {transform_indices = @transform_7, window_bounds = array<i64: 2>}, {transform_indices = @transform_8, window_bounds = array<i64: 8, 128>}]} {
    %c0 = arith.constant 0 : index
    %c0_0 = arith.constant 0 : index
    %0 = vector.load %arg1[%c0, %c0_0] : memref<8x128xf32, #tpu.memory_space<vmem>>, vector<8x128xf32>
    %1 = arith.truncf %0 : vector<8x128xf32> to vector<8x128xbf16>
    %c0_1 = arith.constant 0 : index
    %c0_2 = arith.constant 0 : index
    %2 = vector.load %arg2[%c0_1, %c0_2] : memref<128x256xbf16, #tpu.memory_space<vmem>>, vector<128x256xbf16>
    %cst = arith.constant dense<0.000000e+00> : vector<8x256xf32>
    %3 = tpu.matmul %1, %2, %cst {dimension_numbers = #tpu.dot_dimension_numbers<[1], [0], [0], [1], [0, 0, 1, 1], [], []>} : vector<8x128xbf16>, vector<128x256xbf16>, vector<8x256xf32> -> vector<8x256xf32>
    %c0_3 = arith.constant 0 : index
    %c0_4 = arith.constant 0 : index
    %4 = vector.load %arg3[%c0_3, %c0_4] : memref<1x256xf32, #tpu.memory_space<vmem>>, vector<1x256xf32>
    %5 = vector.broadcast %4 : vector<1x256xf32> to vector<8x256xf32>
    %6 = arith.addf %3, %5 : vector<8x256xf32>
    %7 = vector.extract_strided_slice %6 {offsets = [0, 0], sizes = [8, 128], strides = [1, 1]} : vector<8x256xf32> to vector<8x128xf32>
    %cst_5 = arith.constant 5.000000e-01 : f32
    %8 = vector.broadcast %cst_5 : f32 to vector<8x128xf32>
    %9 = arith.mulf %8, %7 : vector<8x128xf32>
    %cst_6 = arith.constant 0.707106769 : f32
    %10 = vector.broadcast %cst_6 : f32 to vector<8x128xf32>
    %11 = arith.mulf %7, %10 : vector<8x128xf32>
    %12 = math.erf %11 : vector<8x128xf32>
    %cst_7 = arith.constant 1.000000e+00 : f32
    %13 = vector.broadcast %cst_7 : f32 to vector<8x128xf32>
    %14 = arith.addf %13, %12 : vector<8x128xf32>
    %15 = arith.mulf %9, %14 : vector<8x128xf32>
    %16 = vector.extract_strided_slice %6 {offsets = [0, 128], sizes = [8, 128], strides = [1, 1]} : vector<8x256xf32> to vector<8x128xf32>
    %cst_8 = arith.constant 0.000000e+00 : f32
    %17 = vector.broadcast %cst_8 : f32 to vector<8x128xf32>
    %18 = arith.maximumf %16, %17 : vector<8x128xf32>
    %19 = math.absf %16 : vector<8x128xf32>
    %cst_9 = arith.constant 0.000000e+00 : f32
    %20 = vector.broadcast %cst_9 : f32 to vector<8x128xf32>
    %21 = arith.subf %20, %19 : vector<8x128xf32>
    %22 = math.exp %21 : vector<8x128xf32>
    %cst_10 = arith.constant 1.000000e+00 : f32
    %23 = vector.broadcast %cst_10 : f32 to vector<8x128xf32>
    %24 = arith.addf %23, %22 : vector<8x128xf32>
    %25 = math.log %24 : vector<8x128xf32>
    %26 = arith.addf %18, %25 : vector<8x128xf32>
    %c0_11 = arith.constant 0 : index
    %c0_12 = arith.constant 0 : index
    %27 = vector.load %arg4[%c0_11, %c0_12] : memref<256x128xbf16, #tpu.memory_space<vmem>>, vector<256x128xbf16>
    %28 = arith.truncf %15 : vector<8x128xf32> to vector<8x128xbf16>
    %29 = vector.extract_strided_slice %27 {offsets = [0, 0], sizes = [128, 128], strides = [1, 1]} : vector<256x128xbf16> to vector<128x128xbf16>
    %cst_13 = arith.constant dense<0.000000e+00> : vector<8x128xf32>
    %30 = tpu.matmul %28, %29, %cst_13 {dimension_numbers = #tpu.dot_dimension_numbers<[1], [0], [0], [1], [0, 0, 1, 1], [], []>} : vector<8x128xbf16>, vector<128x128xbf16>, vector<8x128xf32> -> vector<8x128xf32>
    %c0_14 = arith.constant 0 : index
    %c0_15 = arith.constant 0 : index
    %31 = vector.load %arg5[%c0_14, %c0_15] : memref<1x128xf32, #tpu.memory_space<vmem>>, vector<1x128xf32>
    %32 = vector.broadcast %31 : vector<1x128xf32> to vector<8x128xf32>
    %33 = arith.addf %30, %32 : vector<8x128xf32>
    %34 = arith.truncf %26 : vector<8x128xf32> to vector<8x128xbf16>
    %35 = vector.extract_strided_slice %27 {offsets = [128, 0], sizes = [128, 128], strides = [1, 1]} : vector<256x128xbf16> to vector<128x128xbf16>
    %cst_16 = arith.constant dense<0.000000e+00> : vector<8x128xf32>
    %36 = tpu.matmul %34, %35, %cst_16 {dimension_numbers = #tpu.dot_dimension_numbers<[1], [0], [0], [1], [0, 0, 1, 1], [], []>} : vector<8x128xbf16>, vector<128x128xbf16>, vector<8x128xf32> -> vector<8x128xf32>
    %c0_17 = arith.constant 0 : index
    %c0_18 = arith.constant 0 : index
    %37 = vector.load %arg6[%c0_17, %c0_18] : memref<1x128xf32, #tpu.memory_space<vmem>>, vector<1x128xf32>
    %38 = vector.broadcast %37 : vector<1x128xf32> to vector<8x128xf32>
    %39 = arith.addf %36, %38 : vector<8x128xf32>
    %c0_19 = arith.constant 0 : index
    %c0_20 = arith.constant 0 : index
    %40 = vector.load %arg7[%c0_19, %c0_20] : memref<4x128xf32, #tpu.memory_space<vmem>>, vector<4x128xf32>
    %41 = vector.extract_strided_slice %40 {offsets = [0, 0], sizes = [1, 128], strides = [1, 1]} : vector<4x128xf32> to vector<1x128xf32>
    %42 = vector.broadcast %41 : vector<1x128xf32> to vector<8x128xf32>
    %43 = arith.mulf %33, %42 : vector<8x128xf32>
    %44 = vector.extract_strided_slice %40 {offsets = [1, 0], sizes = [1, 128], strides = [1, 1]} : vector<4x128xf32> to vector<1x128xf32>
    %45 = vector.broadcast %44 : vector<1x128xf32> to vector<8x128xf32>
    %46 = arith.mulf %39, %45 : vector<8x128xf32>
    %47 = arith.addf %43, %46 : vector<8x128xf32>
    %cst_21 = arith.constant dense<0.000000e+00> : vector<8xf32>
    %48 = vector.multi_reduction <add>, %47, %cst_21 [1] : vector<8x128xf32> to vector<8xf32>
    %49 = vector.shape_cast %48 : vector<8xf32> to vector<8x1xf32>
    %c0_22 = arith.constant 0 : index
    %50 = memref.load %arg8[%c0_22] : memref<2xf32, #tpu.memory_space<smem>>
    %51 = vector.broadcast %50 : f32 to vector<8x1xf32>
    %52 = arith.addf %49, %51 : vector<8x1xf32>
    %53 = vector.extract_strided_slice %40 {offsets = [2, 0], sizes = [1, 128], strides = [1, 1]} : vector<4x128xf32> to vector<1x128xf32>
    %54 = vector.broadcast %53 : vector<1x128xf32> to vector<8x128xf32>
    %55 = arith.mulf %33, %54 : vector<8x128xf32>
    %56 = vector.extract_strided_slice %40 {offsets = [3, 0], sizes = [1, 128], strides = [1, 1]} : vector<4x128xf32> to vector<1x128xf32>
    %57 = vector.broadcast %56 : vector<1x128xf32> to vector<8x128xf32>
    %58 = arith.mulf %39, %57 : vector<8x128xf32>
    %59 = arith.addf %55, %58 : vector<8x128xf32>
    %cst_23 = arith.constant dense<0.000000e+00> : vector<8xf32>
    %60 = vector.multi_reduction <add>, %59, %cst_23 [1] : vector<8x128xf32> to vector<8xf32>
    %61 = vector.shape_cast %60 : vector<8xf32> to vector<8x1xf32>
    %c1 = arith.constant 1 : index
    %62 = memref.load %arg8[%c1] : memref<2xf32, #tpu.memory_space<smem>>
    %63 = vector.broadcast %62 : f32 to vector<8x1xf32>
    %64 = arith.addf %61, %63 : vector<8x1xf32>
    %cst_24 = arith.constant 0.000000e+00 : f32
    %65 = vector.broadcast %cst_24 : f32 to vector<8x1xf32>
    %66 = arith.subf %65, %52 : vector<8x1xf32>
    %67 = math.exp %66 : vector<8x1xf32>
    %cst_25 = arith.constant 1.000000e+00 : f32
    %68 = vector.broadcast %cst_25 : f32 to vector<8x1xf32>
    %69 = arith.addf %68, %67 : vector<8x1xf32>
    %70 = tpu.reciprocal %69 {approx = true} : vector<8x1xf32> -> vector<8x1xf32>
    %cst_26 = arith.constant 0.000000e+00 : f32
    %71 = vector.broadcast %cst_26 : f32 to vector<8x1xf32>
    %72 = arith.subf %71, %64 : vector<8x1xf32>
    %73 = math.exp %72 : vector<8x1xf32>
    %cst_27 = arith.constant 1.000000e+00 : f32
    %74 = vector.broadcast %cst_27 : f32 to vector<8x1xf32>
    %75 = arith.addf %74, %73 : vector<8x1xf32>
    %76 = tpu.reciprocal %75 {approx = true} : vector<8x1xf32> -> vector<8x1xf32>
    %77 = vector.broadcast %70 : vector<8x1xf32> to vector<8x128xf32>
    %78 = arith.mulf %77, %33 : vector<8x128xf32>
    %79 = vector.broadcast %76 : vector<8x1xf32> to vector<8x128xf32>
    %80 = arith.mulf %79, %39 : vector<8x128xf32>
    %81 = arith.addf %78, %80 : vector<8x128xf32>
    %c0_28 = arith.constant 0 : index
    %c0_29 = arith.constant 0 : index
    %82 = vector.load %arg9[%c0_28, %c0_29] : memref<8x128xf32, #tpu.memory_space<vmem>>, vector<8x128xf32>
    tpu.vector_store %arg9[%c0_28, %c0_29], %81 {strides = array<i32>} : memref<8x128xf32, #tpu.memory_space<vmem>>, vector<8x128xf32>,
    return
  }
  func.func @transform_0(%arg0: i32) -> (i32, i32) {
    %c0_i32 = arith.constant 0 : i32
    %c0_i32_0 = arith.constant 0 : i32
    return %arg0, %c0_i32 : i32, i32
  }
  func.func @transform_1(%arg0: i32) -> (i32, i32) {
    %c0_i32 = arith.constant 0 : i32
    %c0_i32_0 = arith.constant 0 : i32
    %c0_i32_1 = arith.constant 0 : i32
    return %c0_i32, %c0_i32_0 : i32, i32
  }
  func.func @transform_2(%arg0: i32) -> (i32, i32) {
    %c0_i32 = arith.constant 0 : i32
    %c0_i32_0 = arith.constant 0 : i32
    %c0_i32_1 = arith.constant 0 : i32
    return %c0_i32, %c0_i32_0 : i32, i32
  }
  func.func @transform_3(%arg0: i32) -> (i32, i32) {
    %c0_i32 = arith.constant 0 : i32
    %c0_i32_0 = arith.constant 0 : i32
    %c0_i32_1 = arith.constant 0 : i32
    return %c0_i32, %c0_i32_0 : i32, i32
  }
  func.func @transform_4(%arg0: i32) -> (i32, i32) {
    %c0_i32 = arith.constant 0 : i32
    %c0_i32_0 = arith.constant 0 : i32
    %c0_i32_1 = arith.constant 0 : i32
    return %c0_i32, %c0_i32_0 : i32, i32
  }
  func.func @transform_5(%arg0: i32) -> (i32, i32) {
    %c0_i32 = arith.constant 0 : i32
    %c0_i32_0 = arith.constant 0 : i32
    %c0_i32_1 = arith.constant 0 : i32
    return %c0_i32, %c0_i32_0 : i32, i32
  }
  func.func @transform_6(%arg0: i32) -> (i32, i32) {
    %c0_i32 = arith.constant 0 : i32
    %c0_i32_0 = arith.constant 0 : i32
    %c0_i32_1 = arith.constant 0 : i32
    return %c0_i32, %c0_i32_0 : i32, i32
  }
  func.func @transform_7(%arg0: i32) -> i32 {
    %c0_i32 = arith.constant 0 : i32
    %c0_i32_0 = arith.constant 0 : i32
    return %c0_i32 : i32
  }
  func.func @transform_8(%arg0: i32) -> (i32, i32) {
    %c0_i32 = arith.constant 0 : i32
    %c0_i32_0 = arith.constant 0 : i32
    return %arg0, %c0_i32 : i32, i32
  }
}

</mosaic_0001>

<llo_original>
// kernel: mstode_forward.1
$region0: #{mstode_forward.1}
  #allocation0 [shape = 'u32[]', space=smem, size = 0x4, offset = 0x4, fixed_abs, tag = 'smem constant byte address 0x4 - core index']
  #allocation1 [shape = 'u32[72,128]{1,0:T(1,128)}', space=vmem, size = 0x9000, scoped, tag = 'internal scratch']
  %s0 = inlined_call_operand.vmem [shape: f32[8,128], index: 0, kind: input, shape index: {}]
  %s1 = inlined_call_operand.hbm [shape: bf16[128,256], index: 1, kind: input, shape index: {}]
  %s2 = inlined_call_operand.vmem [shape: f32[1,256], index: 2, kind: input, shape index: {}]
  %s3 = inlined_call_operand.hbm [shape: bf16[256,128], index: 3, kind: input, shape index: {}]
  %s4 = inlined_call_operand.vmem [shape: f32[1,128], index: 4, kind: input, shape index: {}]
  %s5 = inlined_call_operand.vmem [shape: f32[1,128], index: 5, kind: input, shape index: {}]
  %s6 = inlined_call_operand.vmem [shape: f32[4,128], index: 6, kind: input, shape index: {}]
  %s7 = inlined_call_operand.vmem [shape: f32[2], index: 7, kind: input, shape index: {}]
  %s8 = inlined_call_operand.hbm [shape: f32[8,128], index: 8, kind: output, shape index: {}]
  %s9 = sld [smem:[#allocation0]]
  $region54: #{mstode_forward.1} parent=0
    _
  %s11 = ssub.s32 1, %s9
  %s12 = scalar_select 0, %s11, %s9
  $region1: #{mstode_forward.1} parent=0
    #allocation2 [shape = 'u8[65536]{0}', space=vmem, size = 0x10000, scoped, tag = 'input window, operand 1, single buffered']
    #allocation3 [shape = 's32[1]{0}', space=sflag, size = 0x4, scoped, tag = 'scoped memory for mstode_forward.1']
    #allocation4 [shape = 's32[1]{0}', space=sflag, size = 0x4, scoped, tag = 'scoped memory for mstode_forward.1']
    #allocation5 [shape = 's32[1]{0}', space=sflag, size = 0x4, scoped, tag = 'scoped memory for mstode_forward.1']
    #allocation6 [shape = 'u8[65536]{0}', space=vmem, size = 0x10000, scoped, tag = 'input window, operand 3, single buffered']
    #allocation7 [shape = 's32[1]{0}', space=sflag, size = 0x4, scoped, tag = 'scoped memory for mstode_forward.1']
    #allocation8 [shape = 'u8[512]{0}', space=smem, size = 0x200, scoped, tag = 'input window, operand 7, single buffered']
    #allocation9 [shape = 'u8[4096]{0}', space=vmem, size = 0x1000, scoped, tag = 'output window, operand 0, single buffered']
    %13 = vsyncpa [#allocation3], 0
    %14 = vsyncpa [#allocation7], 0
    %15 = vsyncpa [#allocation5], 0
    %16 = vsyncpa [#allocation4], 0
    // Predicated region
    $region2: #{mstode_forward.1} parent=1 // pred_check
      _
    $region3: #{mstode_forward.1} parent=1 // pred_check_branch
      %18 = sbr.rel (0) target = $region5
    $region4: #{mstode_forward.1} parent=1 // pred_region
      _
    $region5: #{mstode_forward.1} parent=1 // pred_fallthru
      _
    // Predicated region
    $region6: #{mstode_forward.1} parent=1 // pred_check
      _
    $region7: #{mstode_forward.1} parent=1 // pred_check_branch
      %20 = sbr.rel (0) target = $region9
    $region8: #{mstode_forward.1} parent=1 // pred_region
      %22 = vsyncadd [#allocation3], 0
      %s23 = sshll.u32 %s1, 4
      %s24 = int_to_ptr.hbm [resolvable:$true] %s23
      %s25 = sshll.u32 [#allocation2], 4
      %s26 = int_to_ptr.vmem [resolvable:$true] %s25
      %31 = dma.hbm_to_vmem [thread:$0]  %s24, 2048, %s26, [#allocation3], 128, 128, 8
    $region9: #{mstode_forward.1} parent=1 // pred_fallthru
      _
    // Predicated region
    $region10: #{mstode_forward.1} parent=1 // pred_check
      _
    $region11: #{mstode_forward.1} parent=1 // pred_check_branch
      %33 = sbr.rel (0) target = $region13
    $region12: #{mstode_forward.1} parent=1 // pred_region
      _
    $region13: #{mstode_forward.1} parent=1 // pred_fallthru
      _
    // Predicated region
    $region14: #{mstode_forward.1} parent=1 // pred_check
      _
    $region15: #{mstode_forward.1} parent=1 // pred_check_branch
      %35 = sbr.rel (0) target = $region17
    $region16: #{mstode_forward.1} parent=1 // pred_region
      %37 = vsyncadd [#allocation7], 0
      %s38 = sshll.u32 %s3, 4
      %s39 = int_to_ptr.hbm [resolvable:$true] %s38
      %s40 = sshll.u32 [#allocation6], 4
      %s41 = int_to_ptr.vmem [resolvable:$true] %s40
      %46 = dma.hbm_to_vmem [thread:$0]  %s39, 2048, %s41, [#allocation7], 64, 64, 4
    $region17: #{mstode_forward.1} parent=1 // pred_fallthru
      _
    // Predicated region
    $region18: #{mstode_forward.1} parent=1 // pred_check
      _
    $region19: #{mstode_forward.1} parent=1 // pred_check_branch
      %48 = sbr.rel (0) target = $region21
    $region20: #{mstode_forward.1} parent=1 // pred_region
      _
    $region21: #{mstode_forward.1} parent=1 // pred_fallthru
      _
    // Predicated region
    $region22: #{mstode_forward.1} parent=1 // pred_check
      _
    $region23: #{mstode_forward.1} parent=1 // pred_check_branch
      %50 = sbr.rel (0) target = $region25
    $region24: #{mstode_forward.1} parent=1 // pred_region
      _
    $region25: #{mstode_forward.1} parent=1 // pred_fallthru
      _
    // Predicated region
    $region26: #{mstode_forward.1} parent=1 // pred_check
      _
    $region27: #{mstode_forward.1} parent=1 // pred_check_branch
      %52 = sbr.rel (0) target = $region29
    $region28: #{mstode_forward.1} parent=1 // pred_region
      _
    $region29: #{mstode_forward.1} parent=1 // pred_fallthru
      _
    // Predicated region
    $region30: #{mstode_forward.1} parent=1 // pred_check
      _
    $region31: #{mstode_forward.1} parent=1 // pred_check_branch
      %54 = sbr.rel (0) target = $region33
    $region32: #{mstode_forward.1} parent=1 // pred_region
      %56 = vsyncadd [#allocation5], 0
      %s58 = sshll.u32 %s7, 4
      %s59 = int_to_ptr.vmem [resolvable:$true] %s58
      %61 = dma.vmem_to_smem %s59, 16, [#allocation8], [#allocation5]
    $region33: #{mstode_forward.1} parent=1 // pred_fallthru
      _
    // Predicated region
    $region34: #{mstode_forward.1} parent=1 // pred_check
      _
    $region35: #{mstode_forward.1} parent=1 // pred_check_branch
      %63 = sbr.rel (0) target = $region37
    $region36: #{mstode_forward.1} parent=1 // pred_region
      %65 = dma.done [#allocation3], 2048
    $region37: #{mstode_forward.1} parent=1 // pred_fallthru
      _
    // Predicated region
    $region38: #{mstode_forward.1} parent=1 // pred_check
      _
    $region39: #{mstode_forward.1} parent=1 // pred_check_branch
      %67 = sbr.rel (0) target = $region41
    $region40: #{mstode_forward.1} parent=1 // pred_region
      %69 = dma.done [#allocation7], 2048
    $region41: #{mstode_forward.1} parent=1 // pred_fallthru
      _
    // Predicated region
    $region42: #{mstode_forward.1} parent=1 // pred_check
      _
    $region43: #{mstode_forward.1} parent=1 // pred_check_branch
      %71 = sbr.rel (0) target = $region45
    $region44: #{mstode_forward.1} parent=1 // pred_region
      %73 = dma.done [#allocation5], 16
    $region45: #{mstode_forward.1} parent=1 // pred_fallthru
      _
    %74 = sfence
    %v75 = vld [vmem:[%s0] sm:$0xff]
    %v76 = vpack.c.bf16 %v75, %v75
    %v77 = vld [vmem:[#allocation2] sm:$0xff]
    %v78 = vld [vmem:[#allocation2 + $0x8] sm:$0xff]
    %v79 = vld [vmem:[#allocation2 + $0x10] sm:$0xff]
    %v80 = vld [vmem:[#allocation2 + $0x18] sm:$0xff]
    %v81 = vld [vmem:[#allocation2 + $0x20] sm:$0xff]
    %v82 = vld [vmem:[#allocation2 + $0x28] sm:$0xff]
    %v83 = vld [vmem:[#allocation2 + $0x30] sm:$0xff]
    %v84 = vld [vmem:[#allocation2 + $0x38] sm:$0xff]
    %v85 = vld [vmem:[#allocation2 + $0x40] sm:$0xff]
    %v86 = vld [vmem:[#allocation2 + $0x48] sm:$0xff]
    %v87 = vld [vmem:[#allocation2 + $0x50] sm:$0xff]
    %v88 = vld [vmem:[#allocation2 + $0x58] sm:$0xff]
    %v89 = vld [vmem:[#allocation2 + $0x60] sm:$0xff]
    %v90 = vld [vmem:[#allocation2 + $0x68] sm:$0xff]
    %v91 = vld [vmem:[#allocation2 + $0x70] sm:$0xff]
    %v92 = vld [vmem:[#allocation2 + $0x78] sm:$0xff]
    %v93 = vld [vmem:[%s2] sm:$0x3]
    %v95 = vperm.slane %v93, 0
    %v96 = vperm.slane %v93, 1
    %v115 = vunpack.c.l.b16 %v77
    %v116 = vunpack.c.h.b16 %v77
    %v117 = vunpack.c.l.b16 %v78
    %v118 = vunpack.c.h.b16 %v78
    %v119 = vunpack.c.l.b16 %v79
    %v120 = vunpack.c.h.b16 %v79
    %v121 = vunpack.c.l.b16 %v80
    %v122 = vunpack.c.h.b16 %v80
    %v123 = vunpack.c.l.b16 %v81
    %v124 = vunpack.c.h.b16 %v81
    %v125 = vunpack.c.l.b16 %v82
    %v126 = vunpack.c.h.b16 %v82
    %v127 = vunpack.c.l.b16 %v83
    %v128 = vunpack.c.h.b16 %v83
    %v129 = vunpack.c.l.b16 %v84
    %v130 = vunpack.c.h.b16 %v84
    %v131 = vunpack.c.l.b16 %v85
    %v132 = vunpack.c.h.b16 %v85
    %v133 = vunpack.c.l.b16 %v86
    %v134 = vunpack.c.h.b16 %v86
    %v135 = vunpack.c.l.b16 %v87
    %v136 = vunpack.c.h.b16 %v87
    %v137 = vunpack.c.l.b16 %v88
    %v138 = vunpack.c.h.b16 %v88
    %v139 = vunpack.c.l.b16 %v89
    %v140 = vunpack.c.h.b16 %v89
    %v141 = vunpack.c.l.b16 %v90
    %v142 = vunpack.c.h.b16 %v90
    %v143 = vunpack.c.l.b16 %v91
    %v144 = vunpack.c.h.b16 %v91
    %v145 = vunpack.c.l.b16 %v92
    %v146 = vunpack.c.h.b16 %v92
    %v147 = vpack.c.b16 %v117, %v115
    %v148 = vpack.c.b16 %v118, %v116
    %v149 = vpack.c.b16 %v121, %v119
    %v150 = vpack.c.b16 %v122, %v120
    %v151 = vpack.c.b16 %v125, %v123
    %v152 = vpack.c.b16 %v126, %v124
    %v153 = vpack.c.b16 %v129, %v127
    %v154 = vpack.c.b16 %v130, %v128
    %v155 = vpack.c.b16 %v133, %v131
    %v156 = vpack.c.b16 %v134, %v132
    %v157 = vpack.c.b16 %v137, %v135
    %v158 = vpack.c.b16 %v138, %v136
    %v159 = vpack.c.b16 %v141, %v139
    %v160 = vpack.c.b16 %v142, %v140
    %v161 = vpack.c.b16 %v145, %v143
    %v162 = vpack.c.b16 %v146, %v144
    %179 = vmatpush.bf16.msra.mxu0 %v161
    %180 = vmatpush.bf16.msra.mxu0 %v159
    %181 = vmatpush.bf16.msra.mxu0 %v157
    %182 = vmatpush.bf16.msra.mxu0 %v155
    %183 = vmatpush.bf16.msra.mxu0 %v153
    %184 = vmatpush.bf16.msra.mxu0 %v151
    %185 = vmatpush.bf16.msra.mxu0 %v149
    %186 = vmatpush.bf16.msra.mxu0 %v147
    %187 = vmatmul.bf16.gmra.mxu0 %v76
    %v188 = vpop.f32.mrf.mxu0
    %v189 = vadd.f32 %v95, %v188
    %v190 = vpop.f32.mrf.mxu0
    %191 = vdwg.mxu0
    %192 = vmatpush.bf16.msra.mxu0 %v162
    %193 = vmatpush.bf16.msra.mxu0 %v160
    %194 = vmatpush.bf16.msra.mxu0 %v158
    %195 = vmatpush.bf16.msra.mxu0 %v156
    %196 = vmatpush.bf16.msra.mxu0 %v154
    %197 = vmatpush.bf16.msra.mxu0 %v152
    %198 = vmatpush.bf16.msra.mxu0 %v150
    %199 = vmatpush.bf16.msra.mxu0 %v148
    %200 = vmatmul.bf16.gmra.mxu0 %v76
    %v201 = vpop.f32.mrf.mxu0
    %v202 = vadd.f32 %v96, %v201
    %v203 = vpop.f32.mrf.mxu0
    %204 = vdwg.mxu0
    %v205 = vmul.f32 %v189, 0.5
    %v206 = vmul.f32 %v189, 0.70710677
    %v207 = vmul.f32 %v206, %v206
    %v208 = vmin.f32 16.0, %v207
    %v209 = vmul.f32 %v208, 2.1237322e-06
    %v210 = vadd.f32 %v209, 0.00028619796
    %v211 = vmul.f32 %v208, %v210
    %v212 = vadd.f32 %v211, 0.0036580483
    %v213 = vmul.f32 %v208, %v212
    %v214 = vadd.f32 %v213, 0.05243302
    %v215 = vmul.f32 %v208, %v214
    %v216 = vadd.f32 %v215, 0.18741608
    %v217 = vmul.f32 %v208, %v216
    %v218 = vadd.f32 %v217, 1.1283791
    %v219 = vmul.f32 %v206, %v218
    %v220 = vmul.f32 %v208, 3.8918573e-05
    %v221 = vadd.f32 %v220, 0.001143296
    %v222 = vmul.f32 %v208, %v221
    %v223 = vadd.f32 %v222, 0.014752088
    %v224 = vmul.f32 %v208, %v223
    %v225 = vadd.f32 %v224, 0.112945676
    %v226 = vmul.f32 %v208, %v225
    %v227 = vadd.f32 %v226, 0.4994258
    %v228 = vmul.f32 %v208, %v227
    %v229 = vadd.f32 %v228, 1.0
    %v230 = vrcp.pop %v229
    %v231 = vmul.f32 %v229, %v230
    %v232 = vsub.f32 1.0, %v231
    %v233 = vmul.f32 %v230, %v232
    %v234 = vadd.f32 %v230, %v233
    %vm235 = vweird.f32 %v229
    %vm236 = vweird.f32 %v230
    %vm237 = vmor %vm235, %vm236
    %v238 = vsel %vm237, %v230, %v234
    %v239 = vand.u32 2147483647, %v229
    %vm240 = vcmp.eq.f32.partialorder %v239, 8.507059e+37
    %v241 = vand.u32 %v229, 2147483648
    %v242 = vor.u32 1.1754944e-38, %v241
    %v243 = vsel %vm240, %v242, %v238
    %v244 = vmul.f32 %v219, %v243
    %v245 = vmin.f32 %v244, 1.0
    %v246 = vmax.f32 %v245, -1.0
    %v247 = vadd.f32 %v246, 1.0
    %v248 = vmul.f32 %v205, %v247
    %v249 = vmax.f32 %v202, 0.0
    %v250 = vand.u32 2147483647, %v202
    %v251 = vsub.f32 0.0, %v250
    %v252 = vmul.f32 %v251, 1.442695
    %v253 = vpow.pop %v252
    %v254 = vadd.f32 %v253, 1.0
    %v255 = vlog2.pop %v254
    %v256 = vmul.f32 %v255, 0.6931472
    %v257 = vadd.f32 %v249, %v256
    %v258 = vld [vmem:[#allocation6] sm:$0xf]
    %v259 = vld [vmem:[#allocation6 + $0x4] sm:$0xf]
    %v260 = vld [vmem:[#allocation6 + $0x8] sm:$0xf]
    %v261 = vld [vmem:[#allocation6 + $0xc] sm:$0xf]
    %v262 = vld [vmem:[#allocation6 + $0x10] sm:$0xf]
    %v263 = vld [vmem:[#allocation6 + $0x14] sm:$0xf]
    %v264 = vld [vmem:[#allocation6 + $0x18] sm:$0xf]
    %v265 = vld [vmem:[#allocation6 + $0x1c] sm:$0xf]
    %v266 = vld [vmem:[#allocation6 + $0x20] sm:$0xf]
    %v267 = vld [vmem:[#allocation6 + $0x24] sm:$0xf]
    %v268 = vld [vmem:[#allocation6 + $0x28] sm:$0xf]
    %v269 = vld [vmem:[#allocation6 + $0x2c] sm:$0xf]
    %v270 = vld [vmem:[#allocation6 + $0x30] sm:$0xf]
    %v271 = vld [vmem:[#allocation6 + $0x34] sm:$0xf]
    %v272 = vld [vmem:[#allocation6 + $0x38] sm:$0xf]
    %v273 = vld [vmem:[#allocation6 + $0x3c] sm:$0xf]
    %v274 = vld [vmem:[#allocation6 + $0x40] sm:$0xf]
    %v275 = vld [vmem:[#allocation6 + $0x44] sm:$0xf]
    %v276 = vld [vmem:[#allocation6 + $0x48] sm:$0xf]
    %v277 = vld [vmem:[#allocation6 + $0x4c] sm:$0xf]
    %v278 = vld [vmem:[#allocation6 + $0x50] sm:$0xf]
    %v279 = vld [vmem:[#allocation6 + $0x54] sm:$0xf]
    %v280 = vld [vmem:[#allocation6 + $0x58] sm:$0xf]
    %v281 = vld [vmem:[#allocation6 + $0x5c] sm:$0xf]
    %v282 = vld [vmem:[#allocation6 + $0x60] sm:$0xf]
    %v283 = vld [vmem:[#allocation6 + $0x64] sm:$0xf]
    %v284 = vld [vmem:[#allocation6 + $0x68] sm:$0xf]
    %v285 = vld [vmem:[#allocation6 + $0x6c] sm:$0xf]
    %v286 = vld [vmem:[#allocation6 + $0x70] sm:$0xf]
    %v287 = vld [vmem:[#allocation6 + $0x74] sm:$0xf]
    %v288 = vld [vmem:[#allocation6 + $0x78] sm:$0xf]
    %v289 = vld [vmem:[#allocation6 + $0x7c] sm:$0xf]
    %v290 = vpack.c.bf16 %v248, %v248
    %v291 = vld [vmem:[%s4] sm:$0x1]
    %v293 = vperm.slane %v291, 0
    %v311 = vunpack.c.l.b16 %v258
    %v312 = vunpack.c.l.b16 %v259
    %v313 = vunpack.c.l.b16 %v260
    %v314 = vunpack.c.l.b16 %v261
    %v315 = vunpack.c.l.b16 %v262
    %v316 = vunpack.c.l.b16 %v263
    %v317 = vunpack.c.l.b16 %v264
    %v318 = vunpack.c.l.b16 %v265
    %v319 = vunpack.c.l.b16 %v266
    %v320 = vunpack.c.l.b16 %v267
    %v321 = vunpack.c.l.b16 %v268
    %v322 = vunpack.c.l.b16 %v269
    %v323 = vunpack.c.l.b16 %v270
    %v324 = vunpack.c.l.b16 %v271
    %v325 = vunpack.c.l.b16 %v272
    %v326 = vunpack.c.l.b16 %v273
    %v327 = vpack.c.b16 %v312, %v311
    %v328 = vpack.c.b16 %v314, %v313
    %v329 = vpack.c.b16 %v316, %v315
    %v330 = vpack.c.b16 %v318, %v317
    %v331 = vpack.c.b16 %v320, %v319
    %v332 = vpack.c.b16 %v322, %v321
    %v333 = vpack.c.b16 %v324, %v323
    %v334 = vpack.c.b16 %v326, %v325
    %343 = vmatpush.bf16.msra.mxu0 %v334
    %344 = vmatpush.bf16.msra.mxu0 %v333
    %345 = vmatpush.bf16.msra.mxu0 %v332
    %346 = vmatpush.bf16.msra.mxu0 %v331
    %347 = vmatpush.bf16.msra.mxu0 %v330
    %348 = vmatpush.bf16.msra.mxu0 %v329
    %349 = vmatpush.bf16.msra.mxu0 %v328
    %350 = vmatpush.bf16.msra.mxu0 %v327
    %351 = vmatmul.bf16.gmra.mxu0 %v290
    %v352 = vpop.f32.mrf.mxu0
    %v353 = vadd.f32 %v293, %v352
    %v354 = vpop.f32.mrf.mxu0
    %355 = vdwg.mxu0
    %v356 = vpack.c.bf16 %v257, %v257
    %v357 = vld [vmem:[%s5] sm:$0x1]
    %v359 = vperm.slane %v357, 0
    %v377 = vunpack.c.l.b16 %v274
    %v378 = vunpack.c.l.b16 %v275
    %v379 = vunpack.c.l.b16 %v276
    %v380 = vunpack.c.l.b16 %v277
    %v381 = vunpack.c.l.b16 %v278
    %v382 = vunpack.c.l.b16 %v279
    %v383 = vunpack.c.l.b16 %v280
    %v384 = vunpack.c.l.b16 %v281
    %v385 = vunpack.c.l.b16 %v282
    %v386 = vunpack.c.l.b16 %v283
    %v387 = vunpack.c.l.b16 %v284
    %v388 = vunpack.c.l.b16 %v285
    %v389 = vunpack.c.l.b16 %v286
    %v390 = vunpack.c.l.b16 %v287
    %v391 = vunpack.c.l.b16 %v288
    %v392 = vunpack.c.l.b16 %v289
    %v393 = vpack.c.b16 %v378, %v377
    %v394 = vpack.c.b16 %v380, %v379
    %v395 = vpack.c.b16 %v382, %v381
    %v396 = vpack.c.b16 %v384, %v383
    %v397 = vpack.c.b16 %v386, %v385
    %v398 = vpack.c.b16 %v388, %v387
    %v399 = vpack.c.b16 %v390, %v389
    %v400 = vpack.c.b16 %v392, %v391
    %409 = vmatpush.bf16.msra.mxu0 %v400
    %410 = vmatpush.bf16.msra.mxu0 %v399
    %411 = vmatpush.bf16.msra.mxu0 %v398
    %412 = vmatpush.bf16.msra.mxu0 %v397
    %413 = vmatpush.bf16.msra.mxu0 %v396
    %414 = vmatpush.bf16.msra.mxu0 %v395
    %415 = vmatpush.bf16.msra.mxu0 %v394
    %416 = vmatpush.bf16.msra.mxu0 %v393
    %417 = vmatmul.bf16.gmra.mxu0 %v356
    %v418 = vpop.f32.mrf.mxu0
    %v419 = vadd.f32 %v359, %v418
    %v420 = vpop.f32.mrf.mxu0
    %421 = vdwg.mxu0
    %v422 = vld [vmem:[%s6] sm:$0xf]
    %v423 = vperm.slane %v422, 0
    %v424 = vmul.f32 %v353, %v423
    %v425 = vperm.slane %v422, 1
    %v426 = vmul.f32 %v419, %v425
    %v427 = vadd.f32 %v424, %v426
    %428 = vadd.xlane.f32.xlu0 %v427
    %v429 = vpop.xlane.xlu0 %428
    %s430 = sld [smem:[#allocation8]]
    %v431 = vstv %s430
    %v432 = vadd.f32 %v429, %v431
    %v433 = vperm.slane %v422, 2
    %v434 = vmul.f32 %v353, %v433
    %v435 = vperm.slane %v422, 3
    %v436 = vmul.f32 %v419, %v435
    %v437 = vadd.f32 %v434, %v436
    %438 = vadd.xlane.f32.xlu0 %v437
    %v439 = vpop.xlane.xlu0 %438
    %s440 = sld [smem:[#allocation8 + $0x1]]
    %v441 = vstv %s440
    %v442 = vadd.f32 %v439, %v441
    %v443 = vsub.f32 0.0, %v432
    %v444 = vmul.f32 %v443, 1.442695
    %v445 = vpow.pop %v444
    %v446 = vadd.f32 %v445, 1.0
    %v447 = vrcp.pop %v446
    %v448 = vsub.f32 0.0, %v442
    %v449 = vmul.f32 %v448, 1.442695
    %v450 = vpow.pop %v449
    %v451 = vadd.f32 %v450, 1.0
    %v452 = vrcp.pop %v451
    %v453 = vmul.f32 %v447, %v353
    %v454 = vmul.f32 %v452, %v419
    %v455 = vadd.f32 %v453, %v454
    %456 = vst [vmem:[#allocation9] sm:$0xff] %v455
    // Predicated region
    $region46: #{mstode_forward.1} parent=1 // pred_check
      _
    $region47: #{mstode_forward.1} parent=1 // pred_check_branch
      %458 = sbr.rel (0) target = $region49
    $region48: #{mstode_forward.1} parent=1 // pred_region
      %460 = vsyncadd [#allocation4], 0
      %s462 = sshll.u32 [#allocation9], 4
      %s463 = int_to_ptr.vmem [resolvable:$true] %s462
      %s464 = sshll.u32 %s8, 4
      %s465 = int_to_ptr.hbm [resolvable:$true] %s464
      %467 = dma.vmem_to_hbm [thread:$0]  %s463, 128, %s465, [#allocation4]
    $region49: #{mstode_forward.1} parent=1 // pred_fallthru
      _
    // Predicated region
    $region50: #{mstode_forward.1} parent=1 // pred_check
      _
    $region51: #{mstode_forward.1} parent=1 // pred_check_branch
      %469 = sbr.rel (0) target = $region53
    $region52: #{mstode_forward.1} parent=1 // pred_region
      %471 = dma.done [#allocation4], 128
    $region53: #{mstode_forward.1} parent=1 // pred_fallthru
      _
    %472 = vsyncpa [#allocation3], 1
    %473 = vsyncpa [#allocation7], 1
    %474 = vsyncpa [#allocation4], 1
    %475 = vsyncpa [#allocation5], 1

</llo_original>
